<compile_context>
chip_gen: v7x
topology: tpu7x:2x2x1
jax: 0.10.0
libtpu: 0.0.40
codegen_flags: <defaults>
</compile_context>

<pallas_src>
import jax
import jax.numpy as jnp
from jax.experimental import pallas as pl
from jax.experimental.pallas import tpu as pltpu

_LANE = 128


def _rawnet_loss_kernel(n_ref, w_ref, p0_ref, p1_ref, y_ref, out_ref,
                        tot_acc, w_acc):
    i = pl.program_id(0)

    @pl.when(i == 0)
    def _init():
        tot_acc[...] = jnp.zeros_like(tot_acc)
        w_acc[...] = jnp.zeros_like(w_acc)

    p0 = p0_ref[...].astype(jnp.float32)   # (TR, 128) logits for class 0
    p1 = p1_ref[...].astype(jnp.float32)   # (TR, 128) logits for class 1
    y = y_ref[...]                         # (TR, 128) int32 labels

    w0 = w_ref[0]                          # SMEM scalar: weight of class 0
    w1 = w_ref[1]                          # SMEM scalar: weight of class 1
    n_valid = n_ref[0]                     # SMEM scalar: true batch size

    tr, lane = p0.shape
    row_iota = jax.lax.broadcasted_iota(jnp.int32, (tr, lane), 0)
    lane_iota = jax.lax.broadcasted_iota(jnp.int32, (tr, lane), 1)
    idx = (i * tr + row_iota) * lane + lane_iota
    valid = idx < n_valid

    # Element-wise 2-class log-sum-exp (pure VPU/EUP, no per-row XLU reduce).
    m = jnp.maximum(p0, p1)
    lse = m + jnp.log(1.0 + jnp.exp(-jnp.abs(p0 - p1)))

    sel = jnp.where(y == 0, p0, p1)                    # chosen logit
    wi = jnp.where(y == 0, w0, w1)                     # per-sample class weight
    wi = jnp.where(valid, wi, 0.0)                     # padded rows contribute 0

    tot_acc[...] += wi * (lse - sel)
    w_acc[...] += wi

    @pl.when(i == pl.num_programs(0) - 1)
    def _finalize():
        total = jnp.sum(tot_acc[...])                  # single cross-lane reduce
        wsum = jnp.sum(w_acc[...])                     # single cross-lane reduce
        out_ref[...] = jnp.reshape(total / wsum, (1, 1))


def rawnet_loss(pred: jnp.ndarray, audio_class: jnp.ndarray,
                class_weight: jnp.ndarray) -> jnp.ndarray:
    """pred: (N, 2) logits (any float dtype); audio_class: (N,) int; class_weight: (2,)."""
    n, c = pred.shape
    assert c == 2, "RawNetLoss is a binary (bonafide/spoof) weighted CE"

    # --- wrapper-side layout plumbing: batch -> lane axis -------------------
    rows = pl.cdiv(n, _LANE)
    # Row tile: multiple of 8 sublanes, capped at 512 (keeps VMEM tiny even on v7x).
    tr = max(8, min(512, ((rows + 7) // 8) * 8))
    rows_padded = ((rows + tr - 1) // tr) * tr
    pad = rows_padded * _LANE - n

    p0 = jnp.pad(pred[:, 0], (0, pad)).reshape(rows_padded, _LANE)   # keep dtype
    p1 = jnp.pad(pred[:, 1], (0, pad)).reshape(rows_padded, _LANE)
    y2d = jnp.pad(audio_class.astype(jnp.int32), (0, pad)).reshape(rows_padded, _LANE)

    n_arr = jnp.array([n], dtype=jnp.int32)                 # -> SMEM
    w_arr = class_weight.astype(jnp.float32)                # (2,) -> SMEM

    grid = (rows_padded // tr,)

    out = pl.pallas_call(
        _rawnet_loss_kernel,
        out_shape=jax.ShapeDtypeStruct((1, 1), jnp.float32),
        grid_spec=pltpu.PrefetchScalarGridSpec(
            num_scalar_prefetch=2,
            grid=grid,
            in_specs=[
                pl.BlockSpec((tr, _LANE), lambda i, n_ref, w_ref: (i, 0)),
                pl.BlockSpec((tr, _LANE), lambda i, n_ref, w_ref: (i, 0)),
                pl.BlockSpec((tr, _LANE), lambda i, n_ref, w_ref: (i, 0)),
            ],
            out_specs=pl.BlockSpec((1, 1), lambda i, n_ref, w_ref: (0, 0)),
            scratch_shapes=[
                pltpu.VMEM((tr, _LANE), jnp.float32),   # weighted-NLL partials
                pltpu.VMEM((tr, _LANE), jnp.float32),   # weight-sum partials
            ],
        ),
        compiler_params=pltpu.CompilerParams(
            dimension_semantics=("arbitrary",),
        ),
    )(n_arr, w_arr, p0, p1, y2d)
    return out[0, 0]


if __name__ == "__main__":
    key = jax.random.PRNGKey(0)
    k1, k2 = jax.random.split(key)

    batch = 8
    num_classes = 2  # RawNetLoss is a binary (bonafide/spoof) weighted CE

    pred = jax.random.normal(k1, (batch, num_classes), dtype=jnp.float32)
    audio_class = jax.random.randint(k2, (batch,), 0, num_classes, dtype=jnp.int32)

    # Deterministic parameter from the module __init__: weight = [1.0, 9.0]
    class_weight = jnp.array([1.0, 9.0], dtype=jnp.float32)

    loss = rawnet_loss(pred, audio_class, class_weight)
    jax.block_until_ready(loss)

    # Pure-JAX reference (same weighted-mean CE semantics as PyTorch)
    logp = jax.nn.log_softmax(pred, axis=-1)
    nll = -jnp.take_along_axis(logp, audio_class[:, None], axis=-1)[:, 0]
    wi = class_weight[audio_class]
    ref = jnp.sum(wi * nll) / jnp.sum(wi)
    assert jnp.allclose(loss, ref, rtol=1e-5, atol=1e-5), (loss, ref)

    print("KERNEL_OK")
</pallas_src>

<mosaic_0001>
module attributes {stable_mosaic.version = 11 : i64} {
  func.func @_rawnet_loss_kernel(%arg0: i32, %arg1: memref<1xi32, #tpu.memory_space<smem>>, %arg2: memref<2xf32, #tpu.memory_space<smem>>, %arg3: memref<8x128xf32, #tpu.memory_space<vmem>>, %arg4: memref<8x128xf32, #tpu.memory_space<vmem>>, %arg5: memref<8x128xi32, #tpu.memory_space<vmem>>, %arg6: memref<1x1xf32, #tpu.memory_space<vmem>>, %arg7: memref<8x128xf32, #tpu.memory_space<vmem>>, %arg8: memref<8x128xf32, #tpu.memory_space<vmem>>) attributes {dimension_semantics = [#tpu.dimension_semantics<arbitrary>], iteration_bounds = array<i64: 1>, scalar_prefetch = 2 : i64, scratch_operands = 2 : i64, tpu.core_type = #tpu.core_type<tc>, window_params = [{transform_indices = @transform_0, window_bounds = array<i64: 8, 128>}, {transform_indices = @transform_1, window_bounds = array<i64: 8, 128>}, {transform_indices = @transform_2, window_bounds = array<i64: 8, 128>}, {pipeline_mode = #tpu.pipeline_mode<synchronous>, transform_indices = @transform_3, window_bounds = array<i64: 1, 1>}]} {
    %c0_i32 = arith.constant 0 : i32
    %0 = arith.cmpi eq, %arg0, %c0_i32 : i32
    %1 = arith.extui %0 : i1 to i32
    %c0_i32_0 = arith.constant 0 : i32
    %2 = arith.cmpi ne, %1, %c0_i32_0 : i32
    scf.if %2 {
      %cst_22 = arith.constant 0.000000e+00 : f32
      %50 = vector.broadcast %cst_22 : f32 to vector<8x128xf32>
      %c0_23 = arith.constant 0 : index
      %c0_24 = arith.constant 0 : index
      %51 = vector.load %arg7[%c0_23, %c0_24] : memref<8x128xf32, #tpu.memory_space<vmem>>, vector<8x128xf32>
      tpu.vector_store %arg7[%c0_23, %c0_24], %50 {strides = array<i32>} : memref<8x128xf32, #tpu.memory_space<vmem>>, vector<8x128xf32>,
      %cst_25 = arith.constant 0.000000e+00 : f32
      %52 = vector.broadcast %cst_25 : f32 to vector<8x128xf32>
      %c0_26 = arith.constant 0 : index
      %c0_27 = arith.constant 0 : index
      %53 = vector.load %arg8[%c0_26, %c0_27] : memref<8x128xf32, #tpu.memory_space<vmem>>, vector<8x128xf32>
      tpu.vector_store %arg8[%c0_26, %c0_27], %52 {strides = array<i32>} : memref<8x128xf32, #tpu.memory_space<vmem>>, vector<8x128xf32>,
    } else {
    }
    %c0 = arith.constant 0 : index
    %c0_1 = arith.constant 0 : index
    %3 = vector.load %arg3[%c0, %c0_1] : memref<8x128xf32, #tpu.memory_space<vmem>>, vector<8x128xf32>
    %c0_2 = arith.constant 0 : index
    %c0_3 = arith.constant 0 : index
    %4 = vector.load %arg4[%c0_2, %c0_3] : memref<8x128xf32, #tpu.memory_space<vmem>>, vector<8x128xf32>
    %c0_4 = arith.constant 0 : index
    %c0_5 = arith.constant 0 : index
    %5 = vector.load %arg5[%c0_4, %c0_5] : memref<8x128xi32, #tpu.memory_space<vmem>>, vector<8x128xi32>
    %c0_6 = arith.constant 0 : index
    %6 = memref.load %arg2[%c0_6] : memref<2xf32, #tpu.memory_space<smem>>
    %c1 = arith.constant 1 : index
    %7 = memref.load %arg2[%c1] : memref<2xf32, #tpu.memory_space<smem>>
    %c0_7 = arith.constant 0 : index
    %8 = memref.load %arg1[%c0_7] : memref<1xi32, #tpu.memory_space<smem>>
    %9 = tpu.iota {dimensions = array<i32: 0>} : vector<8x128xi32>
    %10 = tpu.iota {dimensions = array<i32: 1>} : vector<8x128xi32>
    %c8_i32 = arith.constant 8 : i32
    %11 = arith.muli %arg0, %c8_i32 : i32
    %12 = vector.broadcast %11 : i32 to vector<8x128xi32>
    %13 = arith.addi %12, %9 : vector<8x128xi32>
    %c128_i32 = arith.constant 128 : i32
    %14 = vector.broadcast %c128_i32 : i32 to vector<8x128xi32>
    %15 = arith.muli %13, %14 : vector<8x128xi32>
    %16 = arith.addi %15, %10 : vector<8x128xi32>
    %17 = vector.broadcast %8 : i32 to vector<8x128xi32>
    %18 = arith.cmpi slt, %16, %17 : vector<8x128xi32>
    %19 = arith.maximumf %3, %4 : vector<8x128xf32>
    %20 = arith.subf %3, %4 : vector<8x128xf32>
    %21 = math.absf %20 : vector<8x128xf32>
    %cst = arith.constant 0.000000e+00 : f32
    %22 = vector.broadcast %cst : f32 to vector<8x128xf32>
    %23 = arith.subf %22, %21 : vector<8x128xf32>
    %24 = math.exp %23 : vector<8x128xf32>
    %cst_8 = arith.constant 1.000000e+00 : f32
    %25 = vector.broadcast %cst_8 : f32 to vector<8x128xf32>
    %26 = arith.addf %25, %24 : vector<8x128xf32>
    %27 = math.log %26 : vector<8x128xf32>
    %28 = arith.addf %19, %27 : vector<8x128xf32>
    %c0_i32_9 = arith.constant 0 : i32
    %29 = vector.broadcast %c0_i32_9 : i32 to vector<8x128xi32>
    %30 = arith.cmpi eq, %5, %29 : vector<8x128xi32>
    %31 = arith.select %30, %3, %4 : vector<8x128xi1>, vector<8x128xf32>
    %c0_i32_10 = arith.constant 0 : i32
    %32 = vector.broadcast %c0_i32_10 : i32 to vector<8x128xi32>
    %33 = arith.cmpi eq, %5, %32 : vector<8x128xi32>
    %34 = vector.broadcast %6 : f32 to vector<8x128xf32>
    %35 = vector.broadcast %7 : f32 to vector<8x128xf32>
    %36 = arith.select %33, %34, %35 : vector<8x128xi1>, vector<8x128xf32>
    %cst_11 = arith.constant 0.000000e+00 : f32
    %37 = vector.broadcast %cst_11 : f32 to vector<8x128xf32>
    %38 = arith.select %18, %36, %37 : vector<8x128xi1>, vector<8x128xf32>
    %c0_12 = arith.constant 0 : index
    %c0_13 = arith.constant 0 : index
    %39 = vector.load %arg7[%c0_12, %c0_13] : memref<8x128xf32, #tpu.memory_space<vmem>>, vector<8x128xf32>
    %40 = arith.subf %28, %31 : vector<8x128xf32>
    %41 = arith.mulf %38, %40 : vector<8x128xf32>
    %42 = arith.addf %39, %41 : vector<8x128xf32>
    %c0_14 = arith.constant 0 : index
    %c0_15 = arith.constant 0 : index
    %43 = vector.load %arg7[%c0_14, %c0_15] : memref<8x128xf32, #tpu.memory_space<vmem>>, vector<8x128xf32>
    tpu.vector_store %arg7[%c0_14, %c0_15], %42 {strides = array<i32>} : memref<8x128xf32, #tpu.memory_space<vmem>>, vector<8x128xf32>,
    %c0_16 = arith.constant 0 : index
    %c0_17 = arith.constant 0 : index
    %44 = vector.load %arg8[%c0_16, %c0_17] : memref<8x128xf32, #tpu.memory_space<vmem>>, vector<8x128xf32>
    %45 = arith.addf %44, %38 : vector<8x128xf32>
    %c0_18 = arith.constant 0 : index
    %c0_19 = arith.constant 0 : index
    %46 = vector.load %arg8[%c0_18, %c0_19] : memref<8x128xf32, #tpu.memory_space<vmem>>, vector<8x128xf32>
    tpu.vector_store %arg8[%c0_18, %c0_19], %45 {strides = array<i32>} : memref<8x128xf32, #tpu.memory_space<vmem>>, vector<8x128xf32>,
    %c0_i32_20 = arith.constant 0 : i32
    %47 = arith.cmpi eq, %arg0, %c0_i32_20 : i32
    %48 = arith.extui %47 : i1 to i32
    %c0_i32_21 = arith.constant 0 : i32
    %49 = arith.cmpi ne, %48, %c0_i32_21 : i32
    scf.if %49 {
      %c0_22 = arith.constant 0 : index
      %c0_23 = arith.constant 0 : index
      %50 = vector.load %arg7[%c0_22, %c0_23] : memref<8x128xf32, #tpu.memory_space<vmem>>, vector<8x128xf32>
      %51 = vector.shape_cast %50 : vector<8x128xf32> to vector<1x8x128xf32>
      %cst_24 = arith.constant dense<0.000000e+00> : vector<1xf32>
      %52 = vector.multi_reduction <add>, %51, %cst_24 [1, 2] : vector<1x8x128xf32> to vector<1xf32>
      %53 = vector.shape_cast %52 : vector<1xf32> to vector<1x1x1xf32>
      %54 = vector.extract %53[0, 0, 0] : f32 from vector<1x1x1xf32>
      %c0_25 = arith.constant 0 : index
      %c0_26 = arith.constant 0 : index
      %55 = vector.load %arg8[%c0_25, %c0_26] : memref<8x128xf32, #tpu.memory_space<vmem>>, vector<8x128xf32>
      %56 = vector.shape_cast %55 : vector<8x128xf32> to vector<1x8x128xf32>
      %cst_27 = arith.constant dense<0.000000e+00> : vector<1xf32>
      %57 = vector.multi_reduction <add>, %56, %cst_27 [1, 2] : vector<1x8x128xf32> to vector<1xf32>
      %58 = vector.shape_cast %57 : vector<1xf32> to vector<1x1x1xf32>
      %59 = vector.extract %58[0, 0, 0] : f32 from vector<1x1x1xf32>
      %60 = arith.divf %54, %59 : f32
      %61 = vector.broadcast %60 : f32 to vector<1x1xf32>
      %c0_28 = arith.constant 0 : index
      %c0_29 = arith.constant 0 : index
      %62 = vector.load %arg6[%c0_28, %c0_29] : memref<1x1xf32, #tpu.memory_space<vmem>>, vector<1x1xf32>
      tpu.vector_store %arg6[%c0_28, %c0_29], %61 {strides = array<i32>} : memref<1x1xf32, #tpu.memory_space<vmem>>, vector<1x1xf32>,
    } else {
    }
    return
  }
  func.func @transform_0(%arg0: i32, %arg1: memref<1xi32, #tpu.memory_space<smem>>, %arg2: memref<2xf32, #tpu.memory_space<smem>>) -> (i32, i32) {
    %c0_i32 = arith.constant 0 : i32
    %c0_i32_0 = arith.constant 0 : i32
    return %arg0, %c0_i32 : i32, i32
  }
  func.func @transform_1(%arg0: i32, %arg1: memref<1xi32, #tpu.memory_space<smem>>, %arg2: memref<2xf32, #tpu.memory_space<smem>>) -> (i32, i32) {
    %c0_i32 = arith.constant 0 : i32
    %c0_i32_0 = arith.constant 0 : i32
    return %arg0, %c0_i32 : i32, i32
  }
  func.func @transform_2(%arg0: i32, %arg1: memref<1xi32, #tpu.memory_space<smem>>, %arg2: memref<2xf32, #tpu.memory_space<smem>>) -> (i32, i32) {
    %c0_i32 = arith.constant 0 : i32
    %c0_i32_0 = arith.constant 0 : i32
    return %arg0, %c0_i32 : i32, i32
  }
  func.func @transform_3(%arg0: i32, %arg1: memref<1xi32, #tpu.memory_space<smem>>, %arg2: memref<2xf32, #tpu.memory_space<smem>>) -> (i32, i32) {
    %c0_i32 = arith.constant 0 : i32
    %c0_i32_0 = arith.constant 0 : i32
    %c0_i32_1 = arith.constant 0 : i32
    return %c0_i32, %c0_i32_0 : i32, i32
  }
}

</mosaic_0001>

<llo_original>
// kernel: tpu_custom_call.1
$region0: #{tpu_custom_call.1}
  #allocation0 [shape = 'u32[]', space=smem, size = 0x4, offset = 0x4, fixed_abs, tag = 'smem constant byte address 0x4 - core index']
  #allocation1 [shape = 'u32[144,128]{1,0:T(1,128)}', space=vmem, size = 0x12000, scoped, tag = 'internal scratch']
  #allocation2 [shape = 'f32[8,128]{1,0:T(8,128)}', space=vmem, size = 0x1000, scoped, tag = 'scratch operand']
  #allocation3 [shape = 'f32[8,128]{1,0:T(8,128)}', space=vmem, size = 0x1000, scoped, tag = 'scratch operand']
  #allocation4 [shape = 's32[1]{0}', space=sflag, size = 0x4, scoped, tag = 'scoped memory for tpu_custom_call.1']
  #allocation5 [shape = 's32[1]{0:T(128)S(6)}', space=smem, size = 0x200, scoped, tag = 'prefetched SMEM operand 0']
  #allocation6 [shape = 'u8[512]{0}', space=smem, size = 0x200, scoped, tag = 'prefetched SMEM operand 1']
  %s0 = inlined_call_operand.<no memory space> [shape: s32[1], index: 0, kind: input, shape index: {}]
  %s1 = inlined_call_operand.vmem [shape: f32[2], index: 1, kind: input, shape index: {}]
  %s2 = inlined_call_operand.hbm [shape: f32[8,128], index: 2, kind: input, shape index: {}]
  %s3 = inlined_call_operand.vmem [shape: f32[8,128], index: 3, kind: input, shape index: {}]
  %s4 = inlined_call_operand.hbm [shape: s32[8,128], index: 4, kind: input, shape index: {}]
  %s5 = inlined_call_operand.hbm [shape: f32[1,1], index: 5, kind: output, shape index: {}]
  %s6 = sld [smem:[#allocation0]]
  $region38: #{tpu_custom_call.1} parent=0
    _
  %s8 = ssub.s32 1, %s6
  %s9 = scalar_select 0, %s8, %s6
  %10 = sst [smem:[#allocation5]] %s0
  %s11 = sshll.u32 %s1, 4
  %s12 = int_to_ptr.vmem [resolvable:$true] %s11
  %14 = dma.vmem_to_smem %s12, 16, [#allocation6], [#allocation4]
  %15 = dma.done [#allocation4], 16
  %16 = sfence
  $region1: #{tpu_custom_call.1} parent=0
    #allocation7 [shape = 'u8[4096]{0}', space=vmem, size = 0x1000, scoped, tag = 'input window, operand 2, single buffered']
    #allocation8 [shape = 's32[1]{0}', space=sflag, size = 0x4, scoped, tag = 'scoped memory for tpu_custom_call.1']
    #allocation9 [shape = 's32[1]{0}', space=sflag, size = 0x4, scoped, tag = 'scoped memory for tpu_custom_call.1']
    #allocation10 [shape = 'u8[4096]{0}', space=vmem, size = 0x1000, scoped, tag = 'input window, operand 4, single buffered']
    #allocation11 [shape = 's32[1]{0}', space=sflag, size = 0x4, scoped, tag = 'scoped memory for tpu_custom_call.1']
    #allocation12 [shape = 'u8[512]{0}', space=vmem, size = 0x400, scoped, tag = 'output window, operand 0, single buffered']
    %17 = vsyncpa [#allocation8], 0
    %18 = vsyncpa [#allocation11], 0
    %19 = vsyncpa [#allocation9], 0
    // Predicated region
    $region2: #{tpu_custom_call.1} parent=1 // pred_check
      _
    $region3: #{tpu_custom_call.1} parent=1 // pred_check_branch
      %21 = sbr.rel (0) target = $region5
    $region4: #{tpu_custom_call.1} parent=1 // pred_region
      %s23 = ssub.s32 128, 128
      %24 = vsyncadd [#allocation8], %s23
      %s26 = sshll.u32 [#allocation7], 4
      %s27 = int_to_ptr.vmem [resolvable:$true] %s26
      %29 = dma.hbm_to_vmem [thread:$0]  %s2, 128, %s27, [#allocation8]
    $region5: #{tpu_custom_call.1} parent=1 // pred_fallthru
      _
    // Predicated region
    $region6: #{tpu_custom_call.1} parent=1 // pred_check
      _
    $region7: #{tpu_custom_call.1} parent=1 // pred_check_branch
      %31 = sbr.rel (0) target = $region9
    $region8: #{tpu_custom_call.1} parent=1 // pred_region
      _
    $region9: #{tpu_custom_call.1} parent=1 // pred_fallthru
      _
    // Predicated region
    $region10: #{tpu_custom_call.1} parent=1 // pred_check
      _
    $region11: #{tpu_custom_call.1} parent=1 // pred_check_branch
      %33 = sbr.rel (0) target = $region13
    $region12: #{tpu_custom_call.1} parent=1 // pred_region
      %s35 = ssub.s32 128, 128
      %36 = vsyncadd [#allocation11], %s35
      %s38 = sshll.u32 [#allocation10], 4
      %s39 = int_to_ptr.vmem [resolvable:$true] %s38
      %41 = dma.hbm_to_vmem [thread:$0]  %s4, 128, %s39, [#allocation11]
    $region13: #{tpu_custom_call.1} parent=1 // pred_fallthru
      _
    // Predicated region
    $region14: #{tpu_custom_call.1} parent=1 // pred_check
      _
    $region15: #{tpu_custom_call.1} parent=1 // pred_check_branch
      %43 = sbr.rel (0) target = $region17
    $region16: #{tpu_custom_call.1} parent=1 // pred_region
      %44 = dma.done [#allocation8], 128
    $region17: #{tpu_custom_call.1} parent=1 // pred_fallthru
      _
    // Predicated region
    $region18: #{tpu_custom_call.1} parent=1 // pred_check
      _
    $region19: #{tpu_custom_call.1} parent=1 // pred_check_branch
      %46 = sbr.rel (0) target = $region21
    $region20: #{tpu_custom_call.1} parent=1 // pred_region
      %47 = dma.done [#allocation11], 128
    $region21: #{tpu_custom_call.1} parent=1 // pred_fallthru
      _
    %p48 = scmp.eq.s32.totalorder 0, 0
    // Predicated region
    $region22: #{tpu_custom_call.1} parent=1 // pred_check
      %p49 = pneg %p48
    $region23: #{tpu_custom_call.1} parent=1 // pred_check_branch
      %51 = sbr.rel (%p49) target = $region25
    $region24: #{tpu_custom_call.1} parent=1 // pred_region
      %52 = vst [vmem:[#allocation2] sm:$0xff] 0.0
      %53 = vst [vmem:[#allocation3] sm:$0xff] 0.0
    $region25: #{tpu_custom_call.1} parent=1 // pred_fallthru
      _
    %v54 = vld [vmem:[#allocation7] sm:$0xff]
    %v55 = vld [vmem:[%s3] sm:$0xff]
    %v56 = vld [vmem:[#allocation10] sm:$0xff]
    %s57 = sld [smem:[#allocation6]]
    %s58 = sld [smem:[#allocation6 + $0x1]]
    %s59 = sld [smem:[#allocation5]]
    %v60 = vlaneseq
    %v61 = vshrl.u32 %v60, 7
    %v62 = vlaneseq
    %v63 = vand.u32 %v62, 127
    %s64 = smul.u32 0, 8
    %v65 = vstv %s64
    %v66 = vadd.s32 %v65, %v61
    %v67 = vmul.u32 %v66, 128
    %v68 = vadd.s32 %v67, %v63
    %v69 = vstv %s59
    %vm70 = vcmp.lt.s32.totalorder %v68, %v69
    %v71 = vmax.f32 %v54, %v55
    %v72 = vsub.f32 %v54, %v55
    %v73 = vand.u32 2147483647, %v72
    %v74 = vsub.f32 0.0, %v73
    %v75 = vmul.f32 %v74, 1.442695
    %v76 = vpow.pop %v75
    %v77 = vadd.f32 %v76, 1.0
    %v78 = vlog2.pop %v77
    %v79 = vmul.f32 %v78, 0.6931472
    %v80 = vadd.f32 %v71, %v79
    %vm81 = vcmp.eq.s32.totalorder %v56, 0
    %v82 = vsel %vm81, %v54, %v55
    %v83 = vstv %s57
    %v84 = vstv %s58
    %v85 = vsel %vm81, %v83, %v84
    %v86 = vsel %vm70, %v85, 0.0
    %v87 = vld [vmem:[#allocation2] sm:$0xff]
    %v88 = vsub.f32 %v80, %v82
    %v89 = vmul.f32 %v86, %v88
    %v90 = vadd.f32 %v87, %v89
    %91 = vst [vmem:[#allocation2] sm:$0xff] %v90
    %v92 = vld [vmem:[#allocation3] sm:$0xff]
    %v93 = vadd.f32 %v92, %v86
    %94 = vst [vmem:[#allocation3] sm:$0xff] %v93
    // Predicated region
    $region26: #{tpu_custom_call.1} parent=1 // pred_check
      %p95 = pneg %p48
    $region27: #{tpu_custom_call.1} parent=1 // pred_check_branch
      %97 = sbr.rel (%p95) target = $region29
    $region28: #{tpu_custom_call.1} parent=1 // pred_region
      %v98 = vld [vmem:[#allocation2] sm:$0xff]
      %99 = vadd.xlane.f32.xlu0 %v98
      %v100 = vpop.xlane.xlu0 %99
      %v101 = vrot.slane %v100, 4
      %v102 = vadd.f32 %v100, %v101
      %v103 = vrot.slane %v102, 2
      %v104 = vadd.f32 %v102, %v103
      %v105 = vrot.slane %v104, 1
      %v106 = vadd.f32 %v104, %v105
      %s107 = vtos %v106
      %v108 = vld [vmem:[#allocation3] sm:$0xff]
      %109 = vadd.xlane.f32.xlu0 %v108
      %v110 = vpop.xlane.xlu0 %109
      %v111 = vrot.slane %v110, 4
      %v112 = vadd.f32 %v110, %v111
      %v113 = vrot.slane %v112, 2
      %v114 = vadd.f32 %v112, %v113
      %v115 = vrot.slane %v114, 1
      %v116 = vadd.f32 %v114, %v115
      %s117 = vtos %v116
      %v118 = vstv %s117
      %v119 = vrcp.pop %v118
      %s120 = vtos %v119
      %s121 = smul.f32 %s107, %s120
      %v122 = vstv %s121
      %vm123 = vcmask 0
      %124 = vst.msk [vmem:[#allocation12] sm:$0x1] %vm123, %v122
    $region29: #{tpu_custom_call.1} parent=1 // pred_fallthru
      _
    // Predicated region
    $region30: #{tpu_custom_call.1} parent=1 // pred_check
      _
    $region31: #{tpu_custom_call.1} parent=1 // pred_check_branch
      %126 = sbr.rel (0) target = $region33
    $region32: #{tpu_custom_call.1} parent=1 // pred_region
      %s128 = ssub.s32 16, 16
      %129 = vsyncadd [#allocation9], %s128
      %s131 = sshll.u32 [#allocation12], 4
      %s132 = int_to_ptr.vmem [resolvable:$true] %s131
      %134 = dma.vmem_to_hbm [thread:$0]  %s132, 16, %s5, [#allocation9]
    $region33: #{tpu_custom_call.1} parent=1 // pred_fallthru
      _
    // Predicated region
    $region34: #{tpu_custom_call.1} parent=1 // pred_check
      _
    $region35: #{tpu_custom_call.1} parent=1 // pred_check_branch
      %136 = sbr.rel (0) target = $region37
    $region36: #{tpu_custom_call.1} parent=1 // pred_region
      %137 = dma.done [#allocation9], 16
    $region37: #{tpu_custom_call.1} parent=1 // pred_fallthru
      _
    %138 = vsyncpa [#allocation8], 1
    %139 = vsyncpa [#allocation11], 1
    %140 = vsyncpa [#allocation9], 1

</llo_original>
